<compile_context>
chip_gen: v5e
topology: v5e:2x2
jax: 0.10.0
libtpu: 0.0.40
codegen_flags: <defaults>
</compile_context>

<pallas_src>
import functools

import jax
import jax.numpy as jnp
from jax import lax
from jax.experimental import pallas as pl
from jax.experimental.pallas import tpu as pltpu

BN_EPS = 1e-5
LANE = 128


def _round_up(x, m):
    return (x + m - 1) // m * m


def _pick_vmem_limit():
    try:
        cap = pltpu.get_tpu_info().vmem_capacity_bytes
        return min(int(cap * 3 // 4), 100 * 1024 * 1024)
    except Exception:
        return 48 * 1024 * 1024  # safe on v5e/v6e/v7x


# --------------------------------------------------------------------------- #
# Kernels: one SAGEConv (+ folded BN) (+ optional ReLU) layer, tiled over rows #
# --------------------------------------------------------------------------- #
def _sage_epilogue(acc, xi, dinv, wl_ref, wr_ref, b_ref, out_ref, apply_relu):
    """Exact f32 mean scale + two fused projections + folded-BN bias (+ReLU)."""
    agg = (acc * dinv).astype(wl_ref.dtype)          # f32 acc * f32 1/deg -> bf16
    h = jnp.dot(agg, wl_ref[...], preferred_element_type=jnp.float32)
    h = h + jnp.dot(xi, wr_ref[...], preferred_element_type=jnp.float32)
    h = h + b_ref[...]
    if apply_relu:
        h = jnp.maximum(h, 0.0)
    out_ref[...] = h.astype(out_ref.dtype)


def _sage_kernel_resident(adj_ref, x_ref, dinv_ref, wl_ref, wr_ref, b_ref,
                          out_ref, acc_ref, *, apply_relu, tile_m, tile_k):
    """X fully VMEM-resident (grid-invariant block); adj streamed as int8.

      adj_ref : (TM, TK)     int8  block (i, k) of 0/1 adjacency counts
      x_ref   : (Npad, C)    bf16  whole feature matrix (resident)
      dinv_ref: (TM, 1)      f32   exact 1/deg for the output rows
      wl_ref  : (C, Co) bf16, wr_ref: (C, Co) bf16, b_ref: (1, Co) f32
      acc_ref : (TM, C)      f32   accumulator for (counts @ X)
    """
    i = pl.program_id(0)
    k = pl.program_id(1)

    @pl.when(k == 0)
    def _():
        acc_ref[...] = jnp.zeros_like(acc_ref)

    kk = pl.multiple_of(k * tile_k, tile_k)
    xk = x_ref[pl.ds(kk, tile_k), :]
    acc_ref[...] += jnp.dot(adj_ref[...].astype(xk.dtype), xk,
                            preferred_element_type=jnp.float32)

    @pl.when(k == pl.num_programs(1) - 1)
    def _():
        ii = pl.multiple_of(i * tile_m, tile_m)
        xi = x_ref[pl.ds(ii, tile_m), :]
        _sage_epilogue(acc_ref[...], xi, dinv_ref[...], wl_ref, wr_ref, b_ref,
                       out_ref, apply_relu)


def _sage_kernel_stream(adj_ref, xk_ref, xi_ref, dinv_ref, wl_ref, wr_ref,
                        b_ref, out_ref, acc_ref, *, apply_relu):
    """Fallback when X does not fit VMEM: X streamed per k-tile (and per i-row)."""
    k = pl.program_id(1)

    @pl.when(k == 0)
    def _():
        acc_ref[...] = jnp.zeros_like(acc_ref)

    acc_ref[...] += jnp.dot(adj_ref[...].astype(xk_ref.dtype), xk_ref[...],
                            preferred_element_type=jnp.float32)

    @pl.when(k == pl.num_programs(1) - 1)
    def _():
        _sage_epilogue(acc_ref[...], xi_ref[...], dinv_ref[...], wl_ref, wr_ref,
                       b_ref, out_ref, apply_relu)


def _sage_layer(adj_i8, x, dinv, wl, wr, bias, *, apply_relu, out_dtype,
                tile_m, tile_k, x_resident, vmem_limit):
    n = adj_i8.shape[0]
    c = x.shape[1]
    co = wl.shape[1]
    grid = (n // tile_m, n // tile_k)

    adj_spec = pl.BlockSpec((tile_m, tile_k), lambda i, k: (i, k))
    dinv_spec = pl.BlockSpec((tile_m, 1), lambda i, k: (i, 0))
    # NOTE: on v7x these grid-invariant specs can also take
    # pipeline_mode=pl.Buffered(1) to reclaim double-buffer VMEM headroom.
    wl_spec = pl.BlockSpec((c, co), lambda i, k: (0, 0))
    wr_spec = pl.BlockSpec((c, co), lambda i, k: (0, 0))
    b_spec = pl.BlockSpec((1, co), lambda i, k: (0, 0))
    out_spec = pl.BlockSpec((tile_m, co), lambda i, k: (i, 0))

    if x_resident:
        kernel = functools.partial(_sage_kernel_resident, apply_relu=apply_relu,
                                   tile_m=tile_m, tile_k=tile_k)
        in_specs = [adj_spec,
                    pl.BlockSpec((n, c), lambda i, k: (0, 0)),   # X resident
                    dinv_spec, wl_spec, wr_spec, b_spec]
        args = (adj_i8, x, dinv, wl, wr, bias)
    else:
        kernel = functools.partial(_sage_kernel_stream, apply_relu=apply_relu)
        in_specs = [adj_spec,
                    pl.BlockSpec((tile_k, c), lambda i, k: (k, 0)),  # agg rows
                    pl.BlockSpec((tile_m, c), lambda i, k: (i, 0)),  # self rows
                    dinv_spec, wl_spec, wr_spec, b_spec]
        args = (adj_i8, x, x, dinv, wl, wr, bias)   # X passed twice (bug fix)

    return pl.pallas_call(
        kernel,
        out_shape=jax.ShapeDtypeStruct((n, co), out_dtype),
        grid_spec=pltpu.PrefetchScalarGridSpec(
            num_scalar_prefetch=0,
            grid=grid,
            in_specs=in_specs,
            out_specs=out_spec,
            scratch_shapes=[pltpu.VMEM((tile_m, c), jnp.float32)],
        ),
        compiler_params=pltpu.CompilerParams(
            dimension_semantics=("parallel", "arbitrary"),
            vmem_limit_bytes=vmem_limit,
        ),
    )(*args)


# --------------------------------------------------------------------------- #
# Host-side parameter folding (eval-mode BN + bias into weights), lane padding #
# --------------------------------------------------------------------------- #
def _fold_and_pad_layer(wl, wr, b, cin_pad, cout_pad, bn=None):
    cin, cout = wl.shape
    if bn is not None:
        gamma, beta, mean, var = bn
        s = gamma * lax.rsqrt(var + BN_EPS)          # (cout,)
        wl = wl * s
        wr = wr * s
        b = (b - mean) * s + beta
    wl_p = jnp.zeros((cin_pad, cout_pad), jnp.float32).at[:cin, :cout].set(wl)
    wr_p = jnp.zeros((cin_pad, cout_pad), jnp.float32).at[:cin, :cout].set(wr)
    bias = jnp.zeros((1, cout_pad), jnp.float32).at[0, :cout].set(b)
    return wl_p.astype(jnp.bfloat16), wr_p.astype(jnp.bfloat16), bias


def multignn_forward(x, edge_index, params, *, tile=None,
                     x_resident_budget=4 * 1024 * 1024):
    """x: [N, Cin] f32; edge_index: [2, E] int32 (row0 = src, row1 = dst)."""
    n, in_c = x.shape
    hid_c = params["wl1"].shape[1]
    out_c = params["wl3"].shape[1]

    if tile is None:
        # Large tiles amortize the ~0.35us/step grid overhead; 128 only for tiny N.
        tile = min(512, _round_up(max(n, 1), LANE))
    assert tile % LANE == 0

    n_pad = _round_up(n, tile)
    cin_p = _round_up(in_c, LANE)
    hid_p = _round_up(hid_c, LANE)
    out_p = _round_up(out_c, LANE)

    # Unnormalized adjacency counts in int8 (halves the dominant HBM stream);
    # exact f32 1/deg applied in the kernel epilogue.  Padded rows/cols are 0,
    # so garbage activations on padded rows never leak into real rows.
    # TODO(synk): assumes < 128 parallel edges per (dst, src) pair.
    src, dst = edge_index[0], edge_index[1]
    counts = jnp.zeros((n_pad, n_pad), jnp.float32).at[dst, src].add(1.0)
    deg = counts.sum(axis=1, keepdims=True)
    dinv = jnp.where(deg > 0, 1.0 / jnp.maximum(deg, 1.0), 0.0).astype(jnp.float32)
    adj_i8 = counts.astype(jnp.int8)

    x_p = (jnp.zeros((n_pad, cin_p), jnp.float32)
           .at[:n, :in_c].set(x).astype(jnp.bfloat16))

    w1l, w1r, b1 = _fold_and_pad_layer(
        params["wl1"], params["wr1"], params["b1"], cin_p, hid_p,
        bn=(params["g1"], params["bt1"], params["m1"], params["v1"]))
    w2l, w2r, b2 = _fold_and_pad_layer(
        params["wl2"], params["wr2"], params["b2"], hid_p, hid_p,
        bn=(params["g2"], params["bt2"], params["m2"], params["v2"]))
    w3l, w3r, b3 = _fold_and_pad_layer(
        params["wl3"], params["wr3"], params["b3"], hid_p, out_p, bn=None)

    # Keep X / h VMEM-resident when it fits a small budget (kills re-read traffic).
    x_resident = n_pad * max(cin_p, hid_p) * 2 <= x_resident_budget
    vmem_limit = _pick_vmem_limit()
    common = dict(tile_m=tile, tile_k=tile, x_resident=x_resident,
                  vmem_limit=vmem_limit)

    h = _sage_layer(adj_i8, x_p, dinv, w1l, w1r, b1, apply_relu=True,
                    out_dtype=jnp.bfloat16, **common)
    h = _sage_layer(adj_i8, h, dinv, w2l, w2r, b2, apply_relu=True,
                    out_dtype=jnp.bfloat16, **common)
    out = _sage_layer(adj_i8, h, dinv, w3l, w3r, b3, apply_relu=False,
                      out_dtype=jnp.float32, **common)
    return out[:n, :out_c]


# --------------------------------------------------------------------------- #
# Test harness                                                                  #
# --------------------------------------------------------------------------- #
def build_adjacency(edge_index, num_nodes):
    """Dense row-normalized (mean) aggregation matrix for the f32 reference."""
    src, dst = edge_index[0], edge_index[1]
    adj = jnp.zeros((num_nodes, num_nodes), jnp.float32)
    adj = adj.at[dst, src].add(1.0)
    deg = adj.sum(axis=1, keepdims=True)
    return adj / jnp.maximum(deg, 1.0)


def init_params(key, in_c, hid_c, out_c):
    ks = jax.random.split(key, 17)

    def lin(k, cin, cout):
        s = 1.0 / jnp.sqrt(jnp.float32(cin))
        return jax.random.uniform(k, (cin, cout), jnp.float32, -s, s)

    return {
        "wl1": lin(ks[0], in_c, hid_c), "wr1": lin(ks[1], in_c, hid_c),
        "b1": 0.1 * jax.random.normal(ks[2], (hid_c,)),
        "g1": 1.0 + 0.1 * jax.random.normal(ks[3], (hid_c,)),
        "bt1": 0.1 * jax.random.normal(ks[4], (hid_c,)),
        "m1": 0.1 * jax.random.normal(ks[5], (hid_c,)),
        "v1": 1.0 + 0.1 * jax.random.uniform(ks[6], (hid_c,)),
        "wl2": lin(ks[7], hid_c, hid_c), "wr2": lin(ks[8], hid_c, hid_c),
        "b2": 0.1 * jax.random.normal(ks[9], (hid_c,)),
        "g2": 1.0 + 0.1 * jax.random.normal(ks[10], (hid_c,)),
        "bt2": 0.1 * jax.random.normal(ks[11], (hid_c,)),
        "m2": 0.1 * jax.random.normal(ks[12], (hid_c,)),
        "v2": 1.0 + 0.1 * jax.random.uniform(ks[13], (hid_c,)),
        "wl3": lin(ks[14], hid_c, out_c), "wr3": lin(ks[15], hid_c, out_c),
        "b3": 0.1 * jax.random.normal(ks[16], (out_c,)),
    }


def reference_forward(adj, x, p):
    def bn(h, g, bt, m, v):
        return (h - m) * (g * lax.rsqrt(v + BN_EPS)) + bt

    h = adj @ x @ p["wl1"] + x @ p["wr1"] + p["b1"]
    h = jnp.maximum(bn(h, p["g1"], p["bt1"], p["m1"], p["v1"]), 0.0)
    h = adj @ h @ p["wl2"] + h @ p["wr2"] + p["b2"]
    h = jnp.maximum(bn(h, p["g2"], p["bt2"], p["m2"], p["v2"]), 0.0)
    return adj @ h @ p["wl3"] + h @ p["wr3"] + p["b3"]


if __name__ == "__main__":
    key = jax.random.PRNGKey(0)
    k_x, k_e, k_p = jax.random.split(key, 3)

    NUM_NODES, IN_C, HID_C, OUT_C, NUM_EDGES = 256, 16, 32, 8, 1024

    x = jax.random.normal(k_x, (NUM_NODES, IN_C), jnp.float32)
    edge_index = jax.random.randint(k_e, (2, NUM_EDGES), 0, NUM_NODES, jnp.int32)
    params = init_params(k_p, IN_C, HID_C, OUT_C)

    # tile=128 only because the demo graph is tiny; default auto-tiling picks
    # up to 512 for non-trivial N.  Grid per layer here: (2, 2).
    out = multignn_forward(x, edge_index, params, tile=128)
    jax.block_until_ready(out)

    adj_dense = build_adjacency(edge_index, NUM_NODES)
    ref = reference_forward(adj_dense, x, params)
    assert out.shape == (NUM_NODES, OUT_C)
    max_err = float(jnp.max(jnp.abs(out - ref)))
    # bf16 MXU operands (features / weights) with f32 accumulation and exact
    # f32 1/deg scaling -> loosened tolerance vs the pure-f32 reference.
    assert jnp.allclose(out, ref, atol=5e-2, rtol=5e-2), f"max abs err {max_err}"

    print("KERNEL_OK")
</pallas_src>

<mosaic_0001>
module attributes {stable_mosaic.version = 11 : i64} {
  func.func @_sage_kernel_resident(%arg0: i32, %arg1: i32, %arg2: memref<128x128xi8, #tpu.memory_space<vmem>>, %arg3: memref<256x128xbf16, #tpu.memory_space<vmem>>, %arg4: memref<128x1xf32, #tpu.memory_space<vmem>>, %arg5: memref<128x128xbf16, #tpu.memory_space<vmem>>, %arg6: memref<128x128xbf16, #tpu.memory_space<vmem>>, %arg7: memref<1x128xf32, #tpu.memory_space<vmem>>, %arg8: memref<128x128xbf16, #tpu.memory_space<vmem>>, %arg9: memref<128x128xf32, #tpu.memory_space<vmem>>) attributes {dimension_semantics = [#tpu.dimension_semantics<parallel>, #tpu.dimension_semantics<arbitrary>], iteration_bounds = array<i64: 2, 2>, scalar_prefetch = 0 : i64, scratch_operands = 1 : i64, tpu.core_type = #tpu.core_type<tc>, window_params = [{transform_indices = @transform_0, window_bounds = array<i64: 128, 128>}, {pipeline_mode = #tpu.pipeline_mode<synchronous>, transform_indices = @transform_1, window_bounds = array<i64: 256, 128>}, {transform_indices = @transform_2, window_bounds = array<i64: 128, 1>}, {pipeline_mode = #tpu.pipeline_mode<synchronous>, transform_indices = @transform_3, window_bounds = array<i64: 128, 128>}, {pipeline_mode = #tpu.pipeline_mode<synchronous>, transform_indices = @transform_4, window_bounds = array<i64: 128, 128>}, {pipeline_mode = #tpu.pipeline_mode<synchronous>, transform_indices = @transform_5, window_bounds = array<i64: 1, 128>}, {transform_indices = @transform_6, window_bounds = array<i64: 128, 128>}]} {
    %c0_i32 = arith.constant 0 : i32
    %0 = arith.cmpi eq, %arg1, %c0_i32 : i32
    %1 = arith.extui %0 : i1 to i32
    %c0_i32_0 = arith.constant 0 : i32
    %2 = arith.cmpi ne, %1, %c0_i32_0 : i32
    scf.if %2 {
      %cst_8 = arith.constant 0.000000e+00 : f32
      %16 = vector.broadcast %cst_8 : f32 to vector<128x128xf32>
      %c0_9 = arith.constant 0 : index
      %c0_10 = arith.constant 0 : index
      %17 = vector.load %arg9[%c0_9, %c0_10] : memref<128x128xf32, #tpu.memory_space<vmem>>, vector<128x128xf32>
      tpu.vector_store %arg9[%c0_9, %c0_10], %16 {strides = array<i32>} : memref<128x128xf32, #tpu.memory_space<vmem>>, vector<128x128xf32>,
    } else {
    }
    %c128_i32 = arith.constant 128 : i32
    %3 = arith.muli %arg1, %c128_i32 : i32
    %4 = tpu.assume_multiple %3, 128 : i32
    %5 = arith.index_cast %4 : i32 to index
    %c0 = arith.constant 0 : index
    %6 = vector.load %arg3[%5, %c0] : memref<256x128xbf16, #tpu.memory_space<vmem>>, vector<128x128xbf16>
    %c0_1 = arith.constant 0 : index
    %c0_2 = arith.constant 0 : index
    %7 = vector.load %arg9[%c0_1, %c0_2] : memref<128x128xf32, #tpu.memory_space<vmem>>, vector<128x128xf32>
    %c0_3 = arith.constant 0 : index
    %c0_4 = arith.constant 0 : index
    %8 = vector.load %arg2[%c0_3, %c0_4] : memref<128x128xi8, #tpu.memory_space<vmem>>, vector<128x128xi8>
    %9 = arith.sitofp %8 : vector<128x128xi8> to vector<128x128xbf16>
    %cst = arith.constant dense<0.000000e+00> : vector<128x128xf32>
    %10 = tpu.matmul %9, %6, %cst {dimension_numbers = #tpu.dot_dimension_numbers<[1], [0], [0], [1], [0, 0, 1, 1], [], []>} : vector<128x128xbf16>, vector<128x128xbf16>, vector<128x128xf32> -> vector<128x128xf32>
    %11 = arith.addf %7, %10 : vector<128x128xf32>
    %c0_5 = arith.constant 0 : index
    %c0_6 = arith.constant 0 : index
    %12 = vector.load %arg9[%c0_5, %c0_6] : memref<128x128xf32, #tpu.memory_space<vmem>>, vector<128x128xf32>
    tpu.vector_store %arg9[%c0_5, %c0_6], %11 {strides = array<i32>} : memref<128x128xf32, #tpu.memory_space<vmem>>, vector<128x128xf32>,
    %c1_i32 = arith.constant 1 : i32
    %13 = arith.cmpi eq, %arg1, %c1_i32 : i32
    %14 = arith.extui %13 : i1 to i32
    %c0_i32_7 = arith.constant 0 : i32
    %15 = arith.cmpi ne, %14, %c0_i32_7 : i32
    scf.if %15 {
      %c128_i32_8 = arith.constant 128 : i32
      %16 = arith.muli %arg0, %c128_i32_8 : i32
      %17 = tpu.assume_multiple %16, 128 : i32
      %18 = arith.index_cast %17 : i32 to index
      %c0_9 = arith.constant 0 : index
      %19 = vector.load %arg3[%18, %c0_9] : memref<256x128xbf16, #tpu.memory_space<vmem>>, vector<128x128xbf16>
      %c0_10 = arith.constant 0 : index
      %c0_11 = arith.constant 0 : index
      %20 = vector.load %arg9[%c0_10, %c0_11] : memref<128x128xf32, #tpu.memory_space<vmem>>, vector<128x128xf32>
      %c0_12 = arith.constant 0 : index
      %c0_13 = arith.constant 0 : index
      %21 = vector.load %arg4[%c0_12, %c0_13] : memref<128x1xf32, #tpu.memory_space<vmem>>, vector<128x1xf32>
      %22 = vector.broadcast %21 : vector<128x1xf32> to vector<128x128xf32>
      %23 = arith.mulf %20, %22 : vector<128x128xf32>
      %24 = arith.truncf %23 : vector<128x128xf32> to vector<128x128xbf16>
      %c0_14 = arith.constant 0 : index
      %c0_15 = arith.constant 0 : index
      %25 = vector.load %arg5[%c0_14, %c0_15] : memref<128x128xbf16, #tpu.memory_space<vmem>>, vector<128x128xbf16>
      %cst_16 = arith.constant dense<0.000000e+00> : vector<128x128xf32>
      %26 = tpu.matmul %24, %25, %cst_16 {dimension_numbers = #tpu.dot_dimension_numbers<[1], [0], [0], [1], [0, 0, 1, 1], [], []>} : vector<128x128xbf16>, vector<128x128xbf16>, vector<128x128xf32> -> vector<128x128xf32>
      %c0_17 = arith.constant 0 : index
      %c0_18 = arith.constant 0 : index
      %27 = vector.load %arg6[%c0_17, %c0_18] : memref<128x128xbf16, #tpu.memory_space<vmem>>, vector<128x128xbf16>
      %cst_19 = arith.constant dense<0.000000e+00> : vector<128x128xf32>
      %28 = tpu.matmul %19, %27, %cst_19 {dimension_numbers = #tpu.dot_dimension_numbers<[1], [0], [0], [1], [0, 0, 1, 1], [], []>} : vector<128x128xbf16>, vector<128x128xbf16>, vector<128x128xf32> -> vector<128x128xf32>
      %29 = arith.addf %26, %28 : vector<128x128xf32>
      %c0_20 = arith.constant 0 : index
      %c0_21 = arith.constant 0 : index
      %30 = vector.load %arg7[%c0_20, %c0_21] : memref<1x128xf32, #tpu.memory_space<vmem>>, vector<1x128xf32>
      %31 = vector.broadcast %30 : vector<1x128xf32> to vector<128x128xf32>
      %32 = arith.addf %29, %31 : vector<128x128xf32>
      %cst_22 = arith.constant 0.000000e+00 : f32
      %33 = vector.broadcast %cst_22 : f32 to vector<128x128xf32>
      %34 = arith.maximumf %32, %33 : vector<128x128xf32>
      %35 = arith.truncf %34 : vector<128x128xf32> to vector<128x128xbf16>
      %c0_23 = arith.constant 0 : index
      %c0_24 = arith.constant 0 : index
      %36 = vector.load %arg8[%c0_23, %c0_24] : memref<128x128xbf16, #tpu.memory_space<vmem>>, vector<128x128xbf16>
      tpu.vector_store %arg8[%c0_23, %c0_24], %35 {strides = array<i32>} : memref<128x128xbf16, #tpu.memory_space<vmem>>, vector<128x128xbf16>,
    } else {
    }
    return
  }
  func.func @transform_0(%arg0: i32, %arg1: i32) -> (i32, i32) {
    %c0_i32 = arith.constant 0 : i32
    return %arg0, %arg1 : i32, i32
  }
  func.func @transform_1(%arg0: i32, %arg1: i32) -> (i32, i32) {
    %c0_i32 = arith.constant 0 : i32
    %c0_i32_0 = arith.constant 0 : i32
    %c0_i32_1 = arith.constant 0 : i32
    return %c0_i32, %c0_i32_0 : i32, i32
  }
  func.func @transform_2(%arg0: i32, %arg1: i32) -> (i32, i32) {
    %c0_i32 = arith.constant 0 : i32
    %c0_i32_0 = arith.constant 0 : i32
    return %arg0, %c0_i32 : i32, i32
  }
  func.func @transform_3(%arg0: i32, %arg1: i32) -> (i32, i32) {
    %c0_i32 = arith.constant 0 : i32
    %c0_i32_0 = arith.constant 0 : i32
    %c0_i32_1 = arith.constant 0 : i32
    return %c0_i32, %c0_i32_0 : i32, i32
  }
  func.func @transform_4(%arg0: i32, %arg1: i32) -> (i32, i32) {
    %c0_i32 = arith.constant 0 : i32
    %c0_i32_0 = arith.constant 0 : i32
    %c0_i32_1 = arith.constant 0 : i32
    return %c0_i32, %c0_i32_0 : i32, i32
  }
  func.func @transform_5(%arg0: i32, %arg1: i32) -> (i32, i32) {
    %c0_i32 = arith.constant 0 : i32
    %c0_i32_0 = arith.constant 0 : i32
    %c0_i32_1 = arith.constant 0 : i32
    return %c0_i32, %c0_i32_0 : i32, i32
  }
  func.func @transform_6(%arg0: i32, %arg1: i32) -> (i32, i32) {
    %c0_i32 = arith.constant 0 : i32
    %c0_i32_0 = arith.constant 0 : i32
    return %arg0, %c0_i32 : i32, i32
  }
}

</mosaic_0001>

<llo_original>
// kernel: tpu_custom_call.1
$region0: #{tpu_custom_call.1}
  #allocation0 [shape = 'u32[]', space=smem, size = 0x4, offset = 0x4, fixed_abs, tag = 'smem constant byte address 0x4 - core index']
  #allocation1 [shape = 'u32[72,128]{1,0:T(1,128)}', space=vmem, size = 0x9000, scoped, tag = 'internal scratch']
  #allocation2 [shape = 'f32[128,128]{1,0:T(8,128)}', space=vmem, size = 0x10000, scoped, tag = 'scratch operand']
  %s0 = inlined_call_operand.vmem [shape: s8[256,256], index: 0, kind: input, shape index: {}]
  %s1 = inlined_call_operand.vmem [shape: bf16[256,128], index: 1, kind: input, shape index: {}]
  %s2 = inlined_call_operand.vmem [shape: f32[256,1], index: 2, kind: input, shape index: {}]
  %s3 = inlined_call_operand.hbm [shape: bf16[128,128], index: 3, kind: input, shape index: {}]
  %s4 = inlined_call_operand.hbm [shape: bf16[128,128], index: 4, kind: input, shape index: {}]
  %s5 = inlined_call_operand.vmem [shape: f32[1,128], index: 5, kind: input, shape index: {}]
  %s6 = inlined_call_operand.hbm [shape: bf16[256,128], index: 6, kind: output, shape index: {}]
  %s7 = sld [smem:[#allocation0]]
  $region111: #{tpu_custom_call.1} parent=0
    _
  %s9 = ssub.s32 1, %s7
  %s10 = scalar_select 0, %s9, %s7
  $region1: #{tpu_custom_call.1} parent=0
    #allocation3 [shape = 'u8[32768]{0}', space=vmem, size = 0x8000, scoped, tag = 'input window, operand 0']
    #allocation4 [shape = 'u8[32768]{0}', space=vmem, size = 0x8000, scoped, tag = 'input window, operand 3, single buffered']
    #allocation5 [shape = 's32[2]{0}', space=sflag, size = 0x8, scoped, tag = 'scoped memory for tpu_custom_call.1']
    #allocation6 [shape = 's32[2]{0}', space=sflag, size = 0x8, scoped, tag = 'scoped memory for tpu_custom_call.1']
    #allocation7 [shape = 'u8[32768]{0}', space=vmem, size = 0x8000, scoped, tag = 'input window, operand 4, single buffered']
    #allocation8 [shape = 's32[1]{0}', space=sflag, size = 0x4, scoped, tag = 'scoped memory for tpu_custom_call.1']
    #allocation9 [shape = 'u8[65536]{0}', space=vmem, size = 0x10000, scoped, tag = 'output window, operand 0']
    %11 = vsyncpa [#allocation5], 0
    %12 = vsyncpa [#allocation8], 0
    %13 = vsyncpa [#allocation6], 0
    %s14 = scalar_lea.sflag [#allocation6], 1
    %15 = vsyncpa %s14, 0
    loop: start=0, step=1, limit=6
    $region2: #{tpu_custom_call.1} parent=1 // loop_pre_header
      _
    $region3: #{tpu_custom_call.1} parent=1 // loop_header
      %s17 = sphi 0, %s21
      %p18 = scmp.ge.s32.totalorder %s17, 6
      %s24 = sphi 0, %s36
      %s25 = sphi 0, %s32
      %s26 = sphi 0, %s24
      %s27 = sphi 0, %s25
      %s28 = sphi 0, %s26
      %s29 = sphi 0, %s27
      %s41 = sphi 0, %s43
      %s44 = sphi 0, %s41
      %s45 = sphi 0, %s44
      %s61 = sphi 0, %s45
      %s65 = sphi 0, %s65
      %s67 = sphi 0, %s65
      %s68 = sphi 0, %s67
      %s82 = sphi 0, %s68
      %s88 = sphi 0, %s90
      %s91 = sphi 0, %s88
      %s92 = sphi 0, %s91
      %s108 = sphi 0, %s92
      %s112 = sphi 0, %s112
      %s114 = sphi 0, %s112
      %s115 = sphi 0, %s114
      %s129 = sphi 0, %s115
      %s133 = sphi 0, %s133
      %s135 = sphi 0, %s133
      %s136 = sphi 0, %s135
      %s150 = sphi 0, %s136
      %s154 = sphi 0, %s154
      %s156 = sphi 0, %s154
      %s157 = sphi 0, %s156
      %s171 = sphi 0, %s157
      %s177 = sphi 0, %s179
      %s180 = sphi 0, %s177
      %s181 = sphi 0, %s180
      %s197 = sphi 0, %s181
    $region4: #{tpu_custom_call.1} parent=1 // loop_header_branch
      %20 = sbr.rel (%p18) target = $region8
    $region5: #{tpu_custom_call.1} parent=1 // loop_body
      %s22 = ssub.s32 %s17, 1
      %s23 = ssub.s32 %s17, 2
      %s30 = sadd.s32 1, %s25
      %p31 = scmp.ge.s32.totalorder %s30, 2
      %s32 = scalar_select %p31, 0, %s30
      %s33 = sadd.s32 1, %s24
      %s34 = scalar_select %p31, %s33, %s24
      %p35 = scmp.ge.s32.totalorder %s34, 2
      %s36 = scalar_select %p35, 0, %s34
      %s37 = ssub.s32 %s24, %s36
      %s38 = ssub.s32 %s25, %s32
      %s39 = sor.u32 %s37, %s38
      %p40 = scmp.eq.s32.totalorder %s39, 0
      %s42 = sadd.s32 %s41, 1
      %s43 = scalar_select %p40, %s41, %s42
      %p46 = pneg %p40
      %p47 = scmp.eq.s32.totalorder %s17, 3
      %p48 = por %p46, %p47
      %p49 = scmp.ne.s32.totalorder %s41, %s44
      %p50 = scmp.eq.s32.totalorder %s17, 0
      %p51 = por %p49, %p50
      %p52 = scmp.ne.s32.totalorder %s41, %s44
      %p53 = scmp.eq.s32.totalorder %s22, 3
      %p54 = por %p52, %p53
      %p55 = scmp.ne.s32.totalorder %s44, %s45
      %p56 = scmp.eq.s32.totalorder %s22, 0
      %p57 = por %p55, %p56
      %p58 = scmp.ne.s32.totalorder %s44, %s45
      %p59 = scmp.eq.s32.totalorder %s23, 3
      %p60 = por %p58, %p59
      %p62 = scmp.ne.s32.totalorder %s45, %s61
      %p63 = scmp.eq.s32.totalorder %s23, 0
      %p64 = por %p62, %p63
      %s66 = sadd.s32 %s65, 1
      %p69 = scmp.eq.s32.totalorder %s17, 3
      %p70 = scmp.ne.s32.totalorder %s65, %s67
      %p71 = scmp.eq.s32.totalorder %s17, 0
      %p72 = por %p70, %p71
      %p73 = scmp.ne.s32.totalorder %s65, %s67
      %p74 = scmp.eq.s32.totalorder %s22, 3
      %p75 = por %p73, %p74
      %p76 = scmp.ne.s32.totalorder %s67, %s68
      %p77 = scmp.eq.s32.totalorder %s22, 0
      %p78 = por %p76, %p77
      %p79 = scmp.ne.s32.totalorder %s67, %s68
      %p80 = scmp.eq.s32.totalorder %s23, 3
      %p81 = por %p79, %p80
      %p83 = scmp.ne.s32.totalorder %s68, %s82
      %p84 = scmp.eq.s32.totalorder %s23, 0
      %p85 = por %p83, %p84
      %s86 = ssub.s32 %s24, %s36
      %p87 = scmp.eq.s32.totalorder %s86, 0
      %s89 = sadd.s32 %s88, 1
      %s90 = scalar_select %p87, %s88, %s89
      %p93 = pneg %p87
      %p94 = scmp.eq.s32.totalorder %s17, 3
      %p95 = por %p93, %p94
      %p96 = scmp.ne.s32.totalorder %s88, %s91
      %p97 = scmp.eq.s32.totalorder %s17, 0
      %p98 = por %p96, %p97
      %p99 = scmp.ne.s32.totalorder %s88, %s91
      %p100 = scmp.eq.s32.totalorder %s22, 3
      %p101 = por %p99, %p100
      %p102 = scmp.ne.s32.totalorder %s91, %s92
      %p103 = scmp.eq.s32.totalorder %s22, 0
      %p104 = por %p102, %p103
      %p105 = scmp.ne.s32.totalorder %s91, %s92
      %p106 = scmp.eq.s32.totalorder %s23, 3
      %p107 = por %p105, %p106
      %p109 = scmp.ne.s32.totalorder %s92, %s108
      %p110 = scmp.eq.s32.totalorder %s23, 0
      %p111 = por %p109, %p110
      %s113 = sadd.s32 %s112, 1
      %p116 = scmp.eq.s32.totalorder %s17, 3
      %p117 = scmp.ne.s32.totalorder %s112, %s114
      %p118 = scmp.eq.s32.totalorder %s17, 0
      %p119 = por %p117, %p118
      %p120 = scmp.ne.s32.totalorder %s112, %s114
      %p121 = scmp.eq.s32.totalorder %s22, 3
      %p122 = por %p120, %p121
      %p123 = scmp.ne.s32.totalorder %s114, %s115
      %p124 = scmp.eq.s32.totalorder %s22, 0
      %p125 = por %p123, %p124
      %p126 = scmp.ne.s32.totalorder %s114, %s115
      %p127 = scmp.eq.s32.totalorder %s23, 3
      %p128 = por %p126, %p127
      %p130 = scmp.ne.s32.totalorder %s115, %s129
      %p131 = scmp.eq.s32.totalorder %s23, 0
      %p132 = por %p130, %p131
      %s134 = sadd.s32 %s133, 1
      %p137 = scmp.eq.s32.totalorder %s17, 3
      %p138 = scmp.ne.s32.totalorder %s133, %s135
      %p139 = scmp.eq.s32.totalorder %s17, 0
      %p140 = por %p138, %p139
      %p141 = scmp.ne.s32.totalorder %s133, %s135
      %p142 = scmp.eq.s32.totalorder %s22, 3
      %p143 = por %p141, %p142
      %p144 = scmp.ne.s32.totalorder %s135, %s136
      %p145 = scmp.eq.s32.totalorder %s22, 0
      %p146 = por %p144, %p145
      %p147 = scmp.ne.s32.totalorder %s135, %s136
      %p148 = scmp.eq.s32.totalorder %s23, 3
      %p149 = por %p147, %p148
      %p151 = scmp.ne.s32.totalorder %s136, %s150
      %p152 = scmp.eq.s32.totalorder %s23, 0
      %p153 = por %p151, %p152
      %s155 = sadd.s32 %s154, 1
      %p158 = scmp.eq.s32.totalorder %s17, 3
      %p159 = scmp.ne.s32.totalorder %s154, %s156
      %p160 = scmp.eq.s32.totalorder %s17, 0
      %p161 = por %p159, %p160
      %p162 = scmp.ne.s32.totalorder %s154, %s156
      %p163 = scmp.eq.s32.totalorder %s22, 3
      %p164 = por %p162, %p163
      %p165 = scmp.ne.s32.totalorder %s156, %s157
      %p166 = scmp.eq.s32.totalorder %s22, 0
      %p167 = por %p165, %p166
      %p168 = scmp.ne.s32.totalorder %s156, %s157
      %p169 = scmp.eq.s32.totalorder %s23, 3
      %p170 = por %p168, %p169
      %p172 = scmp.ne.s32.totalorder %s157, %s171
      %p173 = scmp.eq.s32.totalorder %s23, 0
      %p174 = por %p172, %p173
      %s175 = ssub.s32 %s24, %s36
      %p176 = scmp.eq.s32.totalorder %s175, 0
      %s178 = sadd.s32 %s177, 1
      %s179 = scalar_select %p176, %s177, %s178
      %p182 = pneg %p176
      %p183 = scmp.eq.s32.totalorder %s17, 3
      %p184 = por %p182, %p183
      %p185 = scmp.ne.s32.totalorder %s177, %s180
      %p186 = scmp.eq.s32.totalorder %s17, 0
      %p187 = por %p185, %p186
      %p188 = scmp.ne.s32.totalorder %s177, %s180
      %p189 = scmp.eq.s32.totalorder %s22, 3
      %p190 = por %p188, %p189
      %p191 = scmp.ne.s32.totalorder %s180, %s181
      %p192 = scmp.eq.s32.totalorder %s22, 0
      %p193 = por %p191, %p192
      %p194 = scmp.ne.s32.totalorder %s180, %s181
      %p195 = scmp.eq.s32.totalorder %s23, 3
      %p196 = por %p194, %p195
      %p198 = scmp.ne.s32.totalorder %s181, %s197
      %p199 = scmp.eq.s32.totalorder %s23, 0
      %p200 = por %p198, %p199
      %p201 = scmp.le.s32.totalorder 1, %s17
      %p202 = scmp.lt.s32.totalorder %s17, 5
      %p203 = pnand %p201, %p202
      %p204 = pneg %p203
      // Predicated region
      $region9: #{tpu_custom_call.1} parent=5 // pred_check
        _
      $region10: #{tpu_custom_call.1} parent=5 // pred_check_branch
        %206 = sbr.rel (%p203) target = $region12
      $region11: #{tpu_custom_call.1} parent=5 // pred_region
        %s207 = ssub.s32 %s17, 1
        // Predicated region
        $region13: #{tpu_custom_call.1} parent=11 // pred_check
          %p208 = pneg %p78
        $region14: #{tpu_custom_call.1} parent=11 // pred_check_branch
          %210 = sbr.rel (%p208) target = $region16
        $region15: #{tpu_custom_call.1} parent=11 // pred_region
          _
        $region16: #{tpu_custom_call.1} parent=11 // pred_fallthru
          _
        // Predicated region
        $region17: #{tpu_custom_call.1} parent=11 // pred_check
          %p211 = pneg %p125
        $region18: #{tpu_custom_call.1} parent=11 // pred_check_branch
          %213 = sbr.rel (%p211) target = $region20
        $region19: #{tpu_custom_call.1} parent=11 // pred_region
          %215 = vsyncadd [#allocation5], 0
          %s216 = sshll.u32 %s3, 4
          %s217 = int_to_ptr.hbm [resolvable:$true] %s216
          %s218 = sshll.u32 [#allocation4], 4
          %s219 = int_to_ptr.vmem [resolvable:$true] %s218
          %224 = dma.hbm_to_vmem [thread:$0]  %s217, 1024, %s219, [#allocation5], 64, 64, 4
        $region20: #{tpu_custom_call.1} parent=11 // pred_fallthru
          _
        // Predicated region
        $region21: #{tpu_custom_call.1} parent=11 // pred_check
          %p225 = pneg %p146
        $region22: #{tpu_custom_call.1} parent=11 // pred_check_branch
          %227 = sbr.rel (%p225) target = $region24
        $region23: #{tpu_custom_call.1} parent=11 // pred_region
          %229 = vsyncadd [#allocation8], 0
          %s230 = sshll.u32 %s4, 4
          %s231 = int_to_ptr.hbm [resolvable:$true] %s230
          %s232 = sshll.u32 [#allocation7], 4
          %s233 = int_to_ptr.vmem [resolvable:$true] %s232
          %238 = dma.hbm_to_vmem [thread:$0]  %s231, 1024, %s233, [#allocation8], 64, 64, 4
        $region24: #{tpu_custom_call.1} parent=11 // pred_fallthru
          _
        // Predicated region
        $region25: #{tpu_custom_call.1} parent=11 // pred_check
          %p239 = pneg %p167
        $region26: #{tpu_custom_call.1} parent=11 // pred_check_branch
          %241 = sbr.rel (%p239) target = $region28
        $region27: #{tpu_custom_call.1} parent=11 // pred_region
          _
        $region28: #{tpu_custom_call.1} parent=11 // pred_fallthru
          _
      $region12: #{tpu_custom_call.1} parent=5 // pred_fallthru
        _
      %p242 = scmp.lt.s32.totalorder %s17, 4
      // Predicated region
      $region29: #{tpu_custom_call.1} parent=5 // pred_check
        %p243 = pneg %p242
      $region30: #{tpu_custom_call.1} parent=5 // pred_check_branch
        %245 = sbr.rel (%p243) target = $region32
      $region31: #{tpu_custom_call.1} parent=5 // pred_region
        // Predicated region
        $region33: #{tpu_custom_call.1} parent=31 // pred_check
          %p246 = pneg %p51
        $region34: #{tpu_custom_call.1} parent=31 // pred_check_branch
          %248 = sbr.rel (%p246) target = $region36
        $region35: #{tpu_custom_call.1} parent=31 // pred_region
          %s249 = sand.u32 %s41, 1
          %s250 = sand.u32 %s41, 1
          %s251 = smul.addr %s250, 32
          %s252 = scalar_lea.vmem [#allocation3], %s251
          %s253 = smul.u32 4, %s24
          %s254 = smul.addr %s253, 2
          %s255 = sadd.s32 %s25, %s254
          %s256 = smul.addr %s255, 8
          %s257 = scalar_lea.vmem %s0, %s256
          // Predicated region
          $region37: #{tpu_custom_call.1} parent=35 // pred_check
            _
          $region38: #{tpu_custom_call.1} parent=35 // pred_check_branch
            %259 = sbr.rel (0) target = $region40
          $region39: #{tpu_custom_call.1} parent=35 // pred_region
            // Predicated region
            $region41: #{tpu_custom_call.1} parent=39 // pred_check
              _
            $region42: #{tpu_custom_call.1} parent=39 // pred_check_branch
              %261 = sbr.rel (0) target = $region44
            $region43: #{tpu_custom_call.1} parent=39 // pred_region
              // Predicated region
              $region56: #{tpu_custom_call.1} parent=43 // pred_check
                _
              $region57: #{tpu_custom_call.1} parent=43 // pred_check_branch
                %283 = sbr.rel (0) target = $region59
              $region58: #{tpu_custom_call.1} parent=43 // pred_region
                loop: start=0, step=1, limit=1
                $region60: #{tpu_custom_call.1} parent=58 // loop_pre_header
                  _
                $region61: #{tpu_custom_call.1} parent=58 // loop_header
                  %s285 = sphi 0, %s289
                  %p286 = scmp.ge.s32.totalorder %s285, 1
                  %s290 = sphi %s257, %s257
                  %s291 = sphi %s252, %s252
                $region62: #{tpu_custom_call.1} parent=58 // loop_header_branch
                  %288 = sbr.rel (%p286) target = $region66
                $region63: #{tpu_custom_call.1} parent=58 // loop_body
                  %v292 = vld [vmem:[%s290] sm:$0xff]
                  %293 = vst [vmem:[%s291] sm:$0xff] %v292
                  %v294 = vld [vmem:[%s290 + $0x10] sm:$0xff]
                  %295 = vst [vmem:[%s291 + $0x8] sm:$0xff] %v294
                  %v296 = vld [vmem:[%s290 + $0x20] sm:$0xff]
                  %297 = vst [vmem:[%s291 + $0x10] sm:$0xff] %v296
                  %v298 = vld [vmem:[%s290 + $0x30] sm:$0xff]
                  %299 = vst [vmem:[%s291 + $0x18] sm:$0xff] %v298
                $region64: #{tpu_custom_call.1} parent=58 // loop_footer
                  %s289 = sadd.s32 1, %s285
                $region65: #{tpu_custom_call.1} parent=58 // loop_footer_branch
                  %284 = sbr.rel target = $region61
                $region66: #{tpu_custom_call.1} parent=58 // loop_exit
                  _
              $region59: #{tpu_custom_call.1} parent=43 // pred_fallthru
                _
              // Predicated region
              $region67: #{tpu_custom_call.1} parent=43 // pred_check
                _
              $region68: #{tpu_custom_call.1} parent=43 // pred_check_branch
                %301 = sbr.rel target = $region70
              $region69: #{tpu_custom_call.1} parent=43 // pred_region
                _
              $region70: #{tpu_custom_call.1} parent=43 // pred_fallthru
                _
            $region44: #{tpu_custom_call.1} parent=39 // pred_fallthru
              _
            // Predicated region
            $region45: #{tpu_custom_call.1} parent=39 // pred_check
              _
            $region46: #{tpu_custom_call.1} parent=39 // pred_check_branch
              %263 = sbr.rel target = $region48
            $region47: #{tpu_custom_call.1} parent=39 // pred_region
              %s265 = ssub.s32 256, 1
              loop: start=0, step=1, limit=1
              $region49: #{tpu_custom_call.1} parent=47 // loop_pre_header
                _
              $region50: #{tpu_custom_call.1} parent=47 // loop_header
                %s267 = sphi 0, %s271
                %p268 = scmp.ge.s32.totalorder %s267, 1
                %s272 = sphi %s257, %s257
                %s273 = sphi %s252, %s252
              $region51: #{tpu_custom_call.1} parent=47 // loop_header_branch
                %270 = sbr.rel (%p268) target = $region55
              $region52: #{tpu_custom_call.1} parent=47 // loop_body
                %v274 = vld [vmem:[%s272] sm:%s265]
                %275 = vst [vmem:[%s273] sm:%s265] %v274
                %v276 = vld [vmem:[%s272 + $0x10] sm:%s265]
                %277 = vst [vmem:[%s273 + $0x8] sm:%s265] %v276
                %v278 = vld [vmem:[%s272 + $0x20] sm:%s265]
                %279 = vst [vmem:[%s273 + $0x10] sm:%s265] %v278
                %v280 = vld [vmem:[%s272 + $0x30] sm:%s265]
                %281 = vst [vmem:[%s273 + $0x18] sm:%s265] %v280
              $region53: #{tpu_custom_call.1} parent=47 // loop_footer
                %s271 = sadd.s32 1, %s267
              $region54: #{tpu_custom_call.1} parent=47 // loop_footer_branch
                %266 = sbr.rel target = $region50
              $region55: #{tpu_custom_call.1} parent=47 // loop_exit
                _
            $region48: #{tpu_custom_call.1} parent=39 // pred_fallthru
              _
          $region40: #{tpu_custom_call.1} parent=35 // pred_fallthru
            _
          %302 = vnop
        $region36: #{tpu_custom_call.1} parent=31 // pred_fallthru
          _
        // Predicated region
        $region71: #{tpu_custom_call.1} parent=31 // pred_check
          %p303 = pneg %p98
        $region72: #{tpu_custom_call.1} parent=31 // pred_check_branch
          %305 = sbr.rel (%p303) target = $region74
        $region73: #{tpu_custom_call.1} parent=31 // pred_region
          %s306 = smul.u32 16, %s24
          %p307 = scmp.lt.s32.totalorder %s306, 31
          %s308 = scalar_select %p307, %s306, 31
          %s309 = smul.addr %s308, 8
          %s310 = scalar_lea.vmem %s2, %s309
          %s311 = smul.u32 16, %s24
        $region74: #{tpu_custom_call.1} parent=31 // pred_fallthru
          _
      $region32: #{tpu_custom_call.1} parent=5 // pred_fallthru
        _
      %p312 = scmp.le.s32.totalorder 1, %s17
      %p313 = scmp.lt.s32.totalorder %s17, 5
      %p314 = pnand %p312, %p313
      %p315 = pneg %p314
      // Predicated region
      $region75: #{tpu_custom_call.1} parent=5 // pred_check
        _
      $region76: #{tpu_custom_call.1} parent=5 // pred_check_branch
        %317 = sbr.rel (%p314) target = $region78
      $region77: #{tpu_custom_call.1} parent=5 // pred_region
        %s318 = ssub.s32 %s17, 1
        %s319 = sand.u32 %s44, 1
        %s320 = sand.u32 %s44, 1
        %s321 = smul.addr %s320, 32
        %s322 = scalar_lea.vmem [#allocation3], %s321
        // Predicated region
        $region79: #{tpu_custom_call.1} parent=77 // pred_check
          %p323 = pneg %p57
        $region80: #{tpu_custom_call.1} parent=77 // pred_check_branch
          %325 = sbr.rel (%p323) target = $region82
        $region81: #{tpu_custom_call.1} parent=77 // pred_region
          _
        $region82: #{tpu_custom_call.1} parent=77 // pred_fallthru
          _
        // Predicated region
        $region83: #{tpu_custom_call.1} parent=77 // pred_check
          %p326 = pneg %p125
        $region84: #{tpu_custom_call.1} parent=77 // pred_check_branch
          %328 = sbr.rel (%p326) target = $region86
        $region85: #{tpu_custom_call.1} parent=77 // pred_region
          %330 = dma.done [#allocation5], 1024
        $region86: #{tpu_custom_call.1} parent=77 // pred_fallthru
          _
        // Predicated region
        $region87: #{tpu_custom_call.1} parent=77 // pred_check
          %p331 = pneg %p146
        $region88: #{tpu_custom_call.1} parent=77 // pred_check_branch
          %333 = sbr.rel (%p331) target = $region90
        $region89: #{tpu_custom_call.1} parent=77 // pred_region
          %335 = dma.done [#allocation8], 1024
        $region90: #{tpu_custom_call.1} parent=77 // pred_fallthru
          _
        %s336 = sand.u32 %s44, 1
        %s337 = sand.u32 %s44, 1
        %s338 = smul.addr %s337, 32
        %s339 = scalar_lea.vmem [#allocation3], %s338
        %p340 = pneg %p57
        %p341 = pneg %p54
        %p342 = pneg %p78
        %p343 = pneg %p75
        %s344 = smul.u32 16, %s26
        %p345 = scmp.lt.s32.totalorder %s344, 31
        %s346 = scalar_select %p345, %s344, 31
        %s347 = smul.addr %s346, 8
        %s348 = scalar_lea.vmem %s2, %s347
        %p349 = pneg %p104
        %p350 = pneg %p101
        %p351 = pneg %p125
        %p352 = pneg %p122
        %p353 = pneg %p146
        %p354 = pneg %p143
        %p355 = pneg %p167
        %p356 = pneg %p164
        %p357 = pneg %p193
        %p358 = pneg %p190
        %s359 = sand.u32 %s180, 1
        %s360 = scalar_lea.sflag [#allocation6], %s359
        %s361 = sand.u32 %s180, 1
        %s362 = smul.addr %s361, 64
        %s363 = scalar_lea.vmem [#allocation9], %s362
        %s364 = smul.u32 4, %s26
        %s365 = smul.u32 16, %s26
        %p366 = scmp.lt.s32.totalorder %s365, 31
        %s367 = scalar_select %p366, %s365, 31
        %s368 = smul.addr %s367, 8
        %s369 = scalar_lea.vmem %s2, %s368
        %s370 = smul.u32 16, %s26
        %s371 = smul.u32 16, %s26
        %p372 = scmp.eq.s32.totalorder %s27, 0
        // Predicated region
        $region91: #{tpu_custom_call.1} parent=77 // pred_check
          %p373 = pneg %p372
        $region92: #{tpu_custom_call.1} parent=77 // pred_check_branch
          %375 = sbr.rel (%p373) target = $region94
        $region93: #{tpu_custom_call.1} parent=77 // pred_region
          %376 = vst [vmem:[#allocation2] sm:$0xff] 0.0
          %377 = vst [vmem:[#allocation2 + $0x8] sm:$0xff] 0.0
          %378 = vst [vmem:[#allocation2 + $0x10] sm:$0xff] 0.0
          %379 = vst [vmem:[#allocation2 + $0x18] sm:$0xff] 0.0
          %380 = vst [vmem:[#allocation2 + $0x20] sm:$0xff] 0.0
          %381 = vst [vmem:[#allocation2 + $0x28] sm:$0xff] 0.0
          %382 = vst [vmem:[#allocation2 + $0x30] sm:$0xff] 0.0
          %383 = vst [vmem:[#allocation2 + $0x38] sm:$0xff] 0.0
          %384 = vst [vmem:[#allocation2 + $0x40] sm:$0xff] 0.0
          %385 = vst [vmem:[#allocation2 + $0x48] sm:$0xff] 0.0
          %386 = vst [vmem:[#allocation2 + $0x50] sm:$0xff] 0.0
          %387 = vst [vmem:[#allocation2 + $0x58] sm:$0xff] 0.0
          %388 = vst [vmem:[#allocation2 + $0x60] sm:$0xff] 0.0
          %389 = vst [vmem:[#allocation2 + $0x68] sm:$0xff] 0.0
          %390 = vst [vmem:[#allocation2 + $0x70] sm:$0xff] 0.0
          %391 = vst [vmem:[#allocation2 + $0x78] sm:$0xff] 0.0
        $region94: #{tpu_custom_call.1} parent=77 // pred_fallthru
          _
        %s392 = smul.u32 %s27, 128
        %s393 = sshra.s32 %s392, 3
        %s394 = sand.u32 %s392, 7
        %s395 = smul.addr %s393, 4
        %s396 = scalar_lea.vmem %s1, %s395
        %v397 = vld [vmem:[%s396] sm:$0xf]
        %v398 = vld [vmem:[%s396 + $0x4] sm:$0xf]
        %v399 = vld [vmem:[%s396 + $0x8] sm:$0xf]
        %v400 = vld [vmem:[%s396 + $0xc] sm:$0xf]
        %v401 = vld [vmem:[%s396 + $0x10] sm:$0xf]
        %v402 = vld [vmem:[%s396 + $0x14] sm:$0xf]
        %v403 = vld [vmem:[%s396 + $0x18] sm:$0xf]
        %v404 = vld [vmem:[%s396 + $0x1c] sm:$0xf]
        %v405 = vld [vmem:[%s396 + $0x20] sm:$0xf]
        %v406 = vld [vmem:[%s396 + $0x24] sm:$0xf]
        %v407 = vld [vmem:[%s396 + $0x28] sm:$0xf]
        %v408 = vld [vmem:[%s396 + $0x2c] sm:$0xf]
        %v409 = vld [vmem:[%s396 + $0x30] sm:$0xf]
        %v410 = vld [vmem:[%s396 + $0x34] sm:$0xf]
        %v411 = vld [vmem:[%s396 + $0x38] sm:$0xf]
        %v412 = vld [vmem:[%s396 + $0x3c] sm:$0xf]
        %v413 = vld [vmem:[#allocation2] sm:$0xff]
        %v414 = vld [vmem:[#allocation2 + $0x8] sm:$0xff]
        %v415 = vld [vmem:[#allocation2 + $0x10] sm:$0xff]
        %v416 = vld [vmem:[#allocation2 + $0x18] sm:$0xff]
        %v417 = vld [vmem:[#allocation2 + $0x20] sm:$0xff]
        %v418 = vld [vmem:[#allocation2 + $0x28] sm:$0xff]
        %v419 = vld [vmem:[#allocation2 + $0x30] sm:$0xff]
        %v420 = vld [vmem:[#allocation2 + $0x38] sm:$0xff]
        %v421 = vld [vmem:[#allocation2 + $0x40] sm:$0xff]
        %v422 = vld [vmem:[#allocation2 + $0x48] sm:$0xff]
        %v423 = vld [vmem:[#allocation2 + $0x50] sm:$0xff]
        %v424 = vld [vmem:[#allocation2 + $0x58] sm:$0xff]
        %v425 = vld [vmem:[#allocation2 + $0x60] sm:$0xff]
        %v426 = vld [vmem:[#allocation2 + $0x68] sm:$0xff]
        %v427 = vld [vmem:[#allocation2 + $0x70] sm:$0xff]
        %v428 = vld [vmem:[#allocation2 + $0x78] sm:$0xff]
        %v429 = vld [vmem:[%s322] sm:$0xff]
        %v430 = vld [vmem:[%s322 + $0x8] sm:$0xff]
        %v431 = vld [vmem:[%s322 + $0x10] sm:$0xff]
        %v432 = vld [vmem:[%s322 + $0x18] sm:$0xff]
        %v433 = vunpack.c.0.s8 %v429
        %v434 = vunpack.c.1.s8 %v429
        %v435 = vunpack.c.2.s8 %v429
        %v436 = vunpack.c.3.s8 %v429
        %v437 = vunpack.c.0.s8 %v430
        %v438 = vunpack.c.1.s8 %v430
        %v439 = vunpack.c.2.s8 %v430
        %v440 = vunpack.c.3.s8 %v430
        %v441 = vunpack.c.0.s8 %v431
        %v442 = vunpack.c.1.s8 %v431
        %v443 = vunpack.c.2.s8 %v431
        %v444 = vunpack.c.3.s8 %v431
        %v445 = vunpack.c.0.s8 %v432
        %v446 = vunpack.c.1.s8 %v432
        %v447 = vunpack.c.2.s8 %v432
        %v448 = vunpack.c.3.s8 %v432
        %v449 = vcvt.s32.f32 %v433
        %v450 = vcvt.s32.f32 %v434
        %v451 = vcvt.s32.f32 %v435
        %v452 = vcvt.s32.f32 %v436
        %v453 = vcvt.s32.f32 %v437
        %v454 = vcvt.s32.f32 %v438
        %v455 = vcvt.s32.f32 %v439
        %v456 = vcvt.s32.f32 %v440
        %v457 = vcvt.s32.f32 %v441
        %v458 = vcvt.s32.f32 %v442
        %v459 = vcvt.s32.f32 %v443
        %v460 = vcvt.s32.f32 %v444
        %v461 = vcvt.s32.f32 %v445
        %v462 = vcvt.s32.f32 %v446
        %v463 = vcvt.s32.f32 %v447
        %v464 = vcvt.s32.f32 %v448
        %v465 = vpack.c.bf16 %v450, %v449
        %v466 = vpack.c.bf16 %v452, %v451
        %v467 = vpack.c.bf16 %v454, %v453
        %v468 = vpack.c.bf16 %v456, %v455
        %v469 = vpack.c.bf16 %v458, %v457
        %v470 = vpack.c.bf16 %v460, %v459
        %v471 = vpack.c.bf16 %v462, %v461
        %v472 = vpack.c.bf16 %v464, %v463
        %v489 = vunpack.c.l.b16 %v397
        %v490 = vunpack.c.l.b16 %v398
        %v491 = vunpack.c.l.b16 %v399
        %v492 = vunpack.c.l.b16 %v400
        %v493 = vunpack.c.l.b16 %v401
        %v494 = vunpack.c.l.b16 %v402
        %v495 = vunpack.c.l.b16 %v403
        %v496 = vunpack.c.l.b16 %v404
        %v497 = vunpack.c.l.b16 %v405
        %v498 = vunpack.c.l.b16 %v406
        %v499 = vunpack.c.l.b16 %v407
        %v500 = vunpack.c.l.b16 %v408
        %v501 = vunpack.c.l.b16 %v409
        %v502 = vunpack.c.l.b16 %v410
        %v503 = vunpack.c.l.b16 %v411
        %v504 = vunpack.c.l.b16 %v412
        %v505 = vpack.c.b16 %v490, %v489
        %v506 = vpack.c.b16 %v492, %v491
        %v507 = vpack.c.b16 %v494, %v493
        %v508 = vpack.c.b16 %v496, %v495
        %v509 = vpack.c.b16 %v498, %v497
        %v510 = vpack.c.b16 %v500, %v499
        %v511 = vpack.c.b16 %v502, %v501
        %v512 = vpack.c.b16 %v504, %v503
        %521 = vmatpush.bf16.msra.mxu0 %v512
        %522 = vmatpush.bf16.msra.mxu0 %v511
        %523 = vmatpush.bf16.msra.mxu0 %v510
        %524 = vmatpush.bf16.msra.mxu0 %v509
        %525 = vmatpush.bf16.msra.mxu0 %v508
        %526 = vmatpush.bf16.msra.mxu0 %v507
        %527 = vmatpush.bf16.msra.mxu0 %v506
        %528 = vmatpush.bf16.msra.mxu0 %v505
        %529 = vmatmul.bf16.gmra.mxu0 %v465
        %v530 = vpop.f32.mrf.mxu0
        %v531 = vadd.f32 0.0, %v530
        %v532 = vpop.f32.mrf.mxu0
        %v533 = vadd.f32 0.0, %v532
        %534 = vmatmul.bf16.gmra.mxu0 %v466
        %v535 = vpop.f32.mrf.mxu0
        %v536 = vadd.f32 0.0, %v535
        %v537 = vpop.f32.mrf.mxu0
        %v538 = vadd.f32 0.0, %v537
        %539 = vmatmul.bf16.gmra.mxu0 %v467
        %v540 = vpop.f32.mrf.mxu0
        %v541 = vadd.f32 0.0, %v540
        %v542 = vpop.f32.mrf.mxu0
        %v543 = vadd.f32 0.0, %v542
        %544 = vmatmul.bf16.gmra.mxu0 %v468
        %v545 = vpop.f32.mrf.mxu0
        %v546 = vadd.f32 0.0, %v545
        %v547 = vpop.f32.mrf.mxu0
        %v548 = vadd.f32 0.0, %v547
        %549 = vmatmul.bf16.gmra.mxu0 %v469
        %v550 = vpop.f32.mrf.mxu0
        %v551 = vadd.f32 0.0, %v550
        %v552 = vpop.f32.mrf.mxu0
        %v553 = vadd.f32 0.0, %v552
        %554 = vmatmul.bf16.gmra.mxu0 %v470
        %v555 = vpop.f32.mrf.mxu0
        %v556 = vadd.f32 0.0, %v555
        %v557 = vpop.f32.mrf.mxu0
        %v558 = vadd.f32 0.0, %v557
        %559 = vmatmul.bf16.gmra.mxu0 %v471
        %v560 = vpop.f32.mrf.mxu0
        %v561 = vadd.f32 0.0, %v560
        %v562 = vpop.f32.mrf.mxu0
        %v563 = vadd.f32 0.0, %v562
        %564 = vmatmul.bf16.gmra.mxu0 %v472
        %v565 = vpop.f32.mrf.mxu0
        %v566 = vadd.f32 0.0, %v565
        %v567 = vpop.f32.mrf.mxu0
        %v568 = vadd.f32 0.0, %v567
        %569 = vdwg.mxu0
        %v570 = vadd.f32 %v413, %v531
        %v571 = vadd.f32 %v414, %v533
        %v572 = vadd.f32 %v415, %v536
        %v573 = vadd.f32 %v416, %v538
        %v574 = vadd.f32 %v417, %v541
        %v575 = vadd.f32 %v418, %v543
        %v576 = vadd.f32 %v419, %v546
        %v577 = vadd.f32 %v420, %v548
        %v578 = vadd.f32 %v421, %v551
        %v579 = vadd.f32 %v422, %v553
        %v580 = vadd.f32 %v423, %v556
        %v581 = vadd.f32 %v424, %v558
        %v582 = vadd.f32 %v425, %v561
        %v583 = vadd.f32 %v426, %v563
        %v584 = vadd.f32 %v427, %v566
        %v585 = vadd.f32 %v428, %v568
        %586 = vst [vmem:[#allocation2] sm:$0xff] %v570
        %587 = vst [vmem:[#allocation2 + $0x8] sm:$0xff] %v571
        %588 = vst [vmem:[#allocation2 + $0x10] sm:$0xff] %v572
        %589 = vst [vmem:[#allocation2 + $0x18] sm:$0xff] %v573
        %590 = vst [vmem:[#allocation2 + $0x20] sm:$0xff] %v574
        %591 = vst [vmem:[#allocation2 + $0x28] sm:$0xff] %v575
        %592 = vst [vmem:[#allocation2 + $0x30] sm:$0xff] %v576
        %593 = vst [vmem:[#allocation2 + $0x38] sm:$0xff] %v577
        %594 = vst [vmem:[#allocation2 + $0x40] sm:$0xff] %v578
        %595 = vst [vmem:[#allocation2 + $0x48] sm:$0xff] %v579
        %596 = vst [vmem:[#allocation2 + $0x50] sm:$0xff] %v580
        %597 = vst [vmem:[#allocation2 + $0x58] sm:$0xff] %v581
        %598 = vst [vmem:[#allocation2 + $0x60] sm:$0xff] %v582
        %599 = vst [vmem:[#allocation2 + $0x68] sm:$0xff] %v583
        %600 = vst [vmem:[#allocation2 + $0x70] sm:$0xff] %v584
        %601 = vst [vmem:[#allocation2 + $0x78] sm:$0xff] %v585
        %p602 = scmp.eq.s32.totalorder %s27, 1
        // Predicated region
        $region95: #{tpu_custom_call.1} parent=77 // pred_check
          %p603 = pneg %p602
        $region96: #{tpu_custom_call.1} parent=77 // pred_check_branch
          %605 = sbr.rel (%p603) target = $region98
        $region97: #{tpu_custom_call.1} parent=77 // pred_region
          %s606 = smul.u32 %s26, 128
          %s607 = sshra.s32 %s606, 3
          %s608 = sand.u32 %s606, 7
          %s609 = smul.addr %s607, 4
          %s610 = scalar_lea.vmem %s1, %s609
          %v611 = vld [vmem:[%s610] sm:$0xf]
          %v612 = vld [vmem:[%s610 + $0x4] sm:$0xf]
          %v613 = vld [vmem:[%s610 + $0x8] sm:$0xf]
          %v614 = vld [vmem:[%s610 + $0xc] sm:$0xf]
          %v615 = vld [vmem:[%s610 + $0x10] sm:$0xf]
          %v616 = vld [vmem:[%s610 + $0x14] sm:$0xf]
          %v617 = vld [vmem:[%s610 + $0x18] sm:$0xf]
          %v618 = vld [vmem:[%s610 + $0x1c] sm:$0xf]
          %v619 = vld [vmem:[%s610 + $0x20] sm:$0xf]
          %v620 = vld [vmem:[%s610 + $0x24] sm:$0xf]
          %v621 = vld [vmem:[%s610 + $0x28] sm:$0xf]
          %v622 = vld [vmem:[%s610 + $0x2c] sm:$0xf]
          %v623 = vld [vmem:[%s610 + $0x30] sm:$0xf]
          %v624 = vld [vmem:[%s610 + $0x34] sm:$0xf]
          %v625 = vld [vmem:[%s610 + $0x38] sm:$0xf]
          %v626 = vld [vmem:[%s610 + $0x3c] sm:$0xf]
          %v627 = vld [vmem:[#allocation2] sm:$0xff]
          %v628 = vld [vmem:[#allocation2 + $0x8] sm:$0xff]
          %v629 = vld [vmem:[#allocation2 + $0x10] sm:$0xff]
          %v630 = vld [vmem:[#allocation2 + $0x18] sm:$0xff]
          %v631 = vld [vmem:[#allocation2 + $0x20] sm:$0xff]
          %v632 = vld [vmem:[#allocation2 + $0x28] sm:$0xff]
          %v633 = vld [vmem:[#allocation2 + $0x30] sm:$0xff]
          %v634 = vld [vmem:[#allocation2 + $0x38] sm:$0xff]
          %v635 = vld [vmem:[#allocation2 + $0x40] sm:$0xff]
          %v636 = vld [vmem:[#allocation2 + $0x48] sm:$0xff]
          %v637 = vld [vmem:[#allocation2 + $0x50] sm:$0xff]
          %v638 = vld [vmem:[#allocation2 + $0x58] sm:$0xff]
          %v639 = vld [vmem:[#allocation2 + $0x60] sm:$0xff]
          %v640 = vld [vmem:[#allocation2 + $0x68] sm:$0xff]
          %v641 = vld [vmem:[#allocation2 + $0x70] sm:$0xff]
          %v642 = vld [vmem:[#allocation2 + $0x78] sm:$0xff]
          %v643 = vld [vmem:[%s369] sm:$0xff]
          %v644 = vld [vmem:[%s369 + $0x8] sm:$0xff]
          %v645 = vld [vmem:[%s369 + $0x10] sm:$0xff]
          %v646 = vld [vmem:[%s369 + $0x18] sm:$0xff]
          %v647 = vld [vmem:[%s369 + $0x20] sm:$0xff]
          %v648 = vld [vmem:[%s369 + $0x28] sm:$0xff]
          %v649 = vld [vmem:[%s369 + $0x30] sm:$0xff]
          %v650 = vld [vmem:[%s369 + $0x38] sm:$0xff]
          %v651 = vld [vmem:[%s369 + $0x40] sm:$0xff]
          %v652 = vld [vmem:[%s369 + $0x48] sm:$0xff]
          %v653 = vld [vmem:[%s369 + $0x50] sm:$0xff]
          %v654 = vld [vmem:[%s369 + $0x58] sm:$0xff]
          %v655 = vld [vmem:[%s369 + $0x60] sm:$0xff]
          %v656 = vld [vmem:[%s369 + $0x68] sm:$0xff]
          %v657 = vld [vmem:[%s369 + $0x70] sm:$0xff]
          %v658 = vld [vmem:[%s369 + $0x78] sm:$0xff]
          %660 = vset.pattern.permute.xlu0 0
          %661 = vperm.xlu0 %660, %v643
          %v662 = vpop.permute.xlu0 %661
          %665 = vset.pattern.permute.xlu0 0
          %666 = vperm.xlu0 %665, %v644
          %v667 = vpop.permute.xlu0 %666
          %670 = vset.pattern.permute.xlu0 0
          %671 = vperm.xlu0 %670, %v645
          %v672 = vpop.permute.xlu0 %671
          %675 = vset.pattern.permute.xlu0 0
          %676 = vperm.xlu0 %675, %v646
          %v677 = vpop.permute.xlu0 %676
          %680 = vset.pattern.permute.xlu0 0
          %681 = vperm.xlu0 %680, %v647
          %v682 = vpop.permute.xlu0 %681
          %685 = vset.pattern.permute.xlu0 0
          %686 = vperm.xlu0 %685, %v648
          %v687 = vpop.permute.xlu0 %686
          %690 = vset.pattern.permute.xlu0 0
          %691 = vperm.xlu0 %690, %v649
          %v692 = vpop.permute.xlu0 %691
          %695 = vset.pattern.permute.xlu0 0
          %696 = vperm.xlu0 %695, %v650
          %v697 = vpop.permute.xlu0 %696
          %700 = vset.pattern.permute.xlu0 0
          %701 = vperm.xlu0 %700, %v651
          %v702 = vpop.permute.xlu0 %701
          %705 = vset.pattern.permute.xlu0 0
          %706 = vperm.xlu0 %705, %v652
          %v707 = vpop.permute.xlu0 %706
          %710 = vset.pattern.permute.xlu0 0
          %711 = vperm.xlu0 %710, %v653
          %v712 = vpop.permute.xlu0 %711
          %715 = vset.pattern.permute.xlu0 0
          %716 = vperm.xlu0 %715, %v654
          %v717 = vpop.permute.xlu0 %716
          %720 = vset.pattern.permute.xlu0 0
          %721 = vperm.xlu0 %720, %v655
          %v722 = vpop.permute.xlu0 %721
          %725 = vset.pattern.permute.xlu0 0
          %726 = vperm.xlu0 %725, %v656
          %v727 = vpop.permute.xlu0 %726
          %730 = vset.pattern.permute.xlu0 0
          %731 = vperm.xlu0 %730, %v657
          %v732 = vpop.permute.xlu0 %731
          %735 = vset.pattern.permute.xlu0 0
          %736 = vperm.xlu0 %735, %v658
          %v737 = vpop.permute.xlu0 %736
          %v739 = vmul.f32 %v627, %v662
          %v740 = vmul.f32 %v628, %v667
          %v741 = vmul.f32 %v629, %v672
          %v742 = vmul.f32 %v630, %v677
          %v743 = vmul.f32 %v631, %v682
          %v744 = vmul.f32 %v632, %v687
          %v745 = vmul.f32 %v633, %v692
          %v746 = vmul.f32 %v634, %v697
          %v747 = vmul.f32 %v635, %v702
          %v748 = vmul.f32 %v636, %v707
          %v749 = vmul.f32 %v637, %v712
          %v750 = vmul.f32 %v638, %v717
          %v751 = vmul.f32 %v639, %v722
          %v752 = vmul.f32 %v640, %v727
          %v753 = vmul.f32 %v641, %v732
          %v754 = vmul.f32 %v642, %v737
          %v755 = vpack.c.bf16 %v740, %v739
          %v756 = vpack.c.bf16 %v742, %v741
          %v757 = vpack.c.bf16 %v744, %v743
          %v758 = vpack.c.bf16 %v746, %v745
          %v759 = vpack.c.bf16 %v748, %v747
          %v760 = vpack.c.bf16 %v750, %v749
          %v761 = vpack.c.bf16 %v752, %v751
          %v762 = vpack.c.bf16 %v754, %v753
          %v763 = vld [vmem:[#allocation4] sm:$0xf]
          %v764 = vld [vmem:[#allocation4 + $0x4] sm:$0xf]
          %v765 = vld [vmem:[#allocation4 + $0x8] sm:$0xf]
          %v766 = vld [vmem:[#allocation4 + $0xc] sm:$0xf]
          %v767 = vld [vmem:[#allocation4 + $0x10] sm:$0xf]
          %v768 = vld [vmem:[#allocation4 + $0x14] sm:$0xf]
          %v769 = vld [vmem:[#allocation4 + $0x18] sm:$0xf]
          %v770 = vld [vmem:[#allocation4 + $0x1c] sm:$0xf]
          %v771 = vld [vmem:[#allocation4 + $0x20] sm:$0xf]
          %v772 = vld [vmem:[#allocation4 + $0x24] sm:$0xf]
          %v773 = vld [vmem:[#allocation4 + $0x28] sm:$0xf]
          %v774 = vld [vmem:[#allocation4 + $0x2c] sm:$0xf]
          %v775 = vld [vmem:[#allocation4 + $0x30] sm:$0xf]
          %v776 = vld [vmem:[#allocation4 + $0x34] sm:$0xf]
          %v777 = vld [vmem:[#allocation4 + $0x38] sm:$0xf]
          %v778 = vld [vmem:[#allocation4 + $0x3c] sm:$0xf]
          %v779 = vld [vmem:[#allocation7] sm:$0xf]
          %v780 = vld [vmem:[#allocation7 + $0x4] sm:$0xf]
          %v781 = vld [vmem:[#allocation7 + $0x8] sm:$0xf]
          %v782 = vld [vmem:[#allocation7 + $0xc] sm:$0xf]
          %v783 = vld [vmem:[#allocation7 + $0x10] sm:$0xf]
          %v784 = vld [vmem:[#allocation7 + $0x14] sm:$0xf]
          %v785 = vld [vmem:[#allocation7 + $0x18] sm:$0xf]
          %v786 = vld [vmem:[#allocation7 + $0x1c] sm:$0xf]
          %v787 = vld [vmem:[#allocation7 + $0x20] sm:$0xf]
          %v788 = vld [vmem:[#allocation7 + $0x24] sm:$0xf]
          %v789 = vld [vmem:[#allocation7 + $0x28] sm:$0xf]
          %v790 = vld [vmem:[#allocation7 + $0x2c] sm:$0xf]
          %v791 = vld [vmem:[#allocation7 + $0x30] sm:$0xf]
          %v792 = vld [vmem:[#allocation7 + $0x34] sm:$0xf]
          %v793 = vld [vmem:[#allocation7 + $0x38] sm:$0xf]
          %v794 = vld [vmem:[#allocation7 + $0x3c] sm:$0xf]
          %v811 = vunpack.c.l.b16 %v611
          %v812 = vunpack.c.l.b16 %v612
          %v813 = vunpack.c.l.b16 %v613
          %v814 = vunpack.c.l.b16 %v614
          %v815 = vunpack.c.l.b16 %v615
          %v816 = vunpack.c.l.b16 %v616
          %v817 = vunpack.c.l.b16 %v617
          %v818 = vunpack.c.l.b16 %v618
          %v819 = vunpack.c.l.b16 %v619
          %v820 = vunpack.c.l.b16 %v620
          %v821 = vunpack.c.l.b16 %v621
          %v822 = vunpack.c.l.b16 %v622
          %v823 = vunpack.c.l.b16 %v623
          %v824 = vunpack.c.l.b16 %v624
          %v825 = vunpack.c.l.b16 %v625
          %v826 = vunpack.c.l.b16 %v626
          %v827 = vpack.c.b16 %v812, %v811
          %v828 = vpack.c.b16 %v814, %v813
          %v829 = vpack.c.b16 %v816, %v815
          %v830 = vpack.c.b16 %v818, %v817
          %v831 = vpack.c.b16 %v820, %v819
          %v832 = vpack.c.b16 %v822, %v821
          %v833 = vpack.c.b16 %v824, %v823
          %v834 = vpack.c.b16 %v826, %v825
          %v859 = vunpack.c.l.b16 %v779
          %v860 = vunpack.c.l.b16 %v780
          %v861 = vunpack.c.l.b16 %v781
          %v862 = vunpack.c.l.b16 %v782
          %v863 = vunpack.c.l.b16 %v783
          %v864 = vunpack.c.l.b16 %v784
          %v865 = vunpack.c.l.b16 %v785
          %v866 = vunpack.c.l.b16 %v786
          %v867 = vunpack.c.l.b16 %v787
          %v868 = vunpack.c.l.b16 %v788
          %v869 = vunpack.c.l.b16 %v789
          %v870 = vunpack.c.l.b16 %v790
          %v871 = vunpack.c.l.b16 %v791
          %v872 = vunpack.c.l.b16 %v792
          %v873 = vunpack.c.l.b16 %v793
          %v874 = vunpack.c.l.b16 %v794
          %v875 = vpack.c.b16 %v860, %v859
          %v876 = vpack.c.b16 %v862, %v861
          %v877 = vpack.c.b16 %v864, %v863
          %v878 = vpack.c.b16 %v866, %v865
          %v879 = vpack.c.b16 %v868, %v867
          %v880 = vpack.c.b16 %v870, %v869
          %v881 = vpack.c.b16 %v872, %v871
          %v882 = vpack.c.b16 %v874, %v873
          %891 = vmatpush.bf16.msra.mxu0 %v882
          %892 = vmatpush.bf16.msra.mxu0 %v881
          %893 = vmatpush.bf16.msra.mxu0 %v880
          %894 = vmatpush.bf16.msra.mxu0 %v879
          %895 = vmatpush.bf16.msra.mxu0 %v878
          %896 = vmatpush.bf16.msra.mxu0 %v877
          %897 = vmatpush.bf16.msra.mxu0 %v876
          %898 = vmatpush.bf16.msra.mxu0 %v875
          %899 = vmatmul.bf16.gmra.mxu0 %v827
          %v900 = vpop.f32.mrf.mxu0
          %v901 = vadd.f32 0.0, %v900
          %v902 = vpop.f32.mrf.mxu0
          %v903 = vadd.f32 0.0, %v902
          %904 = vmatmul.bf16.gmra.mxu0 %v828
          %v905 = vpop.f32.mrf.mxu0
          %v906 = vadd.f32 0.0, %v905
          %v907 = vpop.f32.mrf.mxu0
          %v908 = vadd.f32 0.0, %v907
          %909 = vmatmul.bf16.gmra.mxu0 %v829
          %v910 = vpop.f32.mrf.mxu0
          %v911 = vadd.f32 0.0, %v910
          %v912 = vpop.f32.mrf.mxu0
          %v913 = vadd.f32 0.0, %v912
          %914 = vmatmul.bf16.gmra.mxu0 %v830
          %v915 = vpop.f32.mrf.mxu0
          %v916 = vadd.f32 0.0, %v915
          %v917 = vpop.f32.mrf.mxu0
          %v918 = vadd.f32 0.0, %v917
          %919 = vmatmul.bf16.gmra.mxu0 %v831
          %v920 = vpop.f32.mrf.mxu0
          %v921 = vadd.f32 0.0, %v920
          %v922 = vpop.f32.mrf.mxu0
          %v923 = vadd.f32 0.0, %v922
          %924 = vmatmul.bf16.gmra.mxu0 %v832
          %v925 = vpop.f32.mrf.mxu0
          %v926 = vadd.f32 0.0, %v925
          %v927 = vpop.f32.mrf.mxu0
          %v928 = vadd.f32 0.0, %v927
          %929 = vmatmul.bf16.gmra.mxu0 %v833
          %v930 = vpop.f32.mrf.mxu0
          %v931 = vadd.f32 0.0, %v930
          %v932 = vpop.f32.mrf.mxu0
          %v933 = vadd.f32 0.0, %v932
          %934 = vmatmul.bf16.gmra.mxu0 %v834
          %v935 = vpop.f32.mrf.mxu0
          %v936 = vadd.f32 0.0, %v935
          %v937 = vpop.f32.mrf.mxu0
          %v938 = vadd.f32 0.0, %v937
          %939 = vdwg.mxu0
          %v956 = vunpack.c.l.b16 %v763
          %v957 = vunpack.c.l.b16 %v764
          %v958 = vunpack.c.l.b16 %v765
          %v959 = vunpack.c.l.b16 %v766
          %v960 = vunpack.c.l.b16 %v767
          %v961 = vunpack.c.l.b16 %v768
          %v962 = vunpack.c.l.b16 %v769
          %v963 = vunpack.c.l.b16 %v770
          %v964 = vunpack.c.l.b16 %v771
          %v965 = vunpack.c.l.b16 %v772
          %v966 = vunpack.c.l.b16 %v773
          %v967 = vunpack.c.l.b16 %v774
          %v968 = vunpack.c.l.b16 %v775
          %v969 = vunpack.c.l.b16 %v776
          %v970 = vunpack.c.l.b16 %v777
          %v971 = vunpack.c.l.b16 %v778
          %v972 = vpack.c.b16 %v957, %v956
          %v973 = vpack.c.b16 %v959, %v958
          %v974 = vpack.c.b16 %v961, %v960
          %v975 = vpack.c.b16 %v963, %v962
          %v976 = vpack.c.b16 %v965, %v964
          %v977 = vpack.c.b16 %v967, %v966
          %v978 = vpack.c.b16 %v969, %v968
          %v979 = vpack.c.b16 %v971, %v970
          %988 = vmatpush.bf16.msra.mxu0 %v979
          %989 = vmatpush.bf16.msra.mxu0 %v978
          %990 = vmatpush.bf16.msra.mxu0 %v977
          %991 = vmatpush.bf16.msra.mxu0 %v976
          %992 = vmatpush.bf16.msra.mxu0 %v975
          %993 = vmatpush.bf16.msra.mxu0 %v974
          %994 = vmatpush.bf16.msra.mxu0 %v973
          %995 = vmatpush.bf16.msra.mxu0 %v972
          %996 = vmatmul.bf16.gmra.mxu0 %v755
          %v997 = vpop.f32.mrf.mxu0
          %v998 = vadd.f32 %v901, %v997
          %v999 = vpop.f32.mrf.mxu0
          %v1000 = vadd.f32 %v903, %v999
          %1001 = vmatmul.bf16.gmra.mxu0 %v756
          %v1002 = vpop.f32.mrf.mxu0
          %v1003 = vadd.f32 %v906, %v1002
          %v1004 = vpop.f32.mrf.mxu0
          %v1005 = vadd.f32 %v908, %v1004
          %1006 = vmatmul.bf16.gmra.mxu0 %v757
          %v1007 = vpop.f32.mrf.mxu0
          %v1008 = vadd.f32 %v911, %v1007
          %v1009 = vpop.f32.mrf.mxu0
          %v1010 = vadd.f32 %v913, %v1009
          %1011 = vmatmul.bf16.gmra.mxu0 %v758
          %v1012 = vpop.f32.mrf.mxu0
          %v1013 = vadd.f32 %v916, %v1012
          %v1014 = vpop.f32.mrf.mxu0
          %v1015 = vadd.f32 %v918, %v1014
          %1016 = vmatmul.bf16.gmra.mxu0 %v759
          %v1017 = vpop.f32.mrf.mxu0
          %v1018 = vadd.f32 %v921, %v1017
          %v1019 = vpop.f32.mrf.mxu0
          %v1020 = vadd.f32 %v923, %v1019
          %1021 = vmatmul.bf16.gmra.mxu0 %v760
          %v1022 = vpop.f32.mrf.mxu0
          %v1023 = vadd.f32 %v926, %v1022
          %v1024 = vpop.f32.mrf.mxu0
          %v1025 = vadd.f32 %v928, %v1024
          %1026 = vmatmul.bf16.gmra.mxu0 %v761
          %v1027 = vpop.f32.mrf.mxu0
          %v1028 = vadd.f32 %v931, %v1027
          %v1029 = vpop.f32.mrf.mxu0
          %v1030 = vadd.f32 %v933, %v1029
          %1031 = vmatmul.bf16.gmra.mxu0 %v762
          %v1032 = vpop.f32.mrf.mxu0
          %v1033 = vadd.f32 %v936, %v1032
          %v1034 = vpop.f32.mrf.mxu0
          %v1035 = vadd.f32 %v938, %v1034
          %1036 = vdwg.mxu0
          %v1037 = vld [vmem:[%s5] sm:$0x1]
          %v1039 = vperm.slane %v1037, 0
          %v1041 = vadd.f32 %v998, %v1039
          %v1042 = vadd.f32 %v1000, %v1039
          %v1043 = vadd.f32 %v1003, %v1039
          %v1044 = vadd.f32 %v1005, %v1039
          %v1045 = vadd.f32 %v1008, %v1039
          %v1046 = vadd.f32 %v1010, %v1039
          %v1047 = vadd.f32 %v1013, %v1039
          %v1048 = vadd.f32 %v1015, %v1039
          %v1049 = vadd.f32 %v1018, %v1039
          %v1050 = vadd.f32 %v1020, %v1039
          %v1051 = vadd.f32 %v1023, %v1039
          %v1052 = vadd.f32 %v1025, %v1039
          %v1053 = vadd.f32 %v1028, %v1039
          %v1054 = vadd.f32 %v1030, %v1039
          %v1055 = vadd.f32 %v1033, %v1039
          %v1056 = vadd.f32 %v1035, %v1039
          %v1057 = vmax.f32 %v1041, 0.0
          %v1058 = vmax.f32 %v1042, 0.0
          %v1059 = vmax.f32 %v1043, 0.0
          %v1060 = vmax.f32 %v1044, 0.0
          %v1061 = vmax.f32 %v1045, 0.0
          %v1062 = vmax.f32 %v1046, 0.0
          %v1063 = vmax.f32 %v1047, 0.0
          %v1064 = vmax.f32 %v1048, 0.0
          %v1065 = vmax.f32 %v1049, 0.0
          %v1066 = vmax.f32 %v1050, 0.0
          %v1067 = vmax.f32 %v1051, 0.0
          %v1068 = vmax.f32 %v1052, 0.0
          %v1069 = vmax.f32 %v1053, 0.0
          %v1070 = vmax.f32 %v1054, 0.0
          %v1071 = vmax.f32 %v1055, 0.0
          %v1072 = vmax.f32 %v1056, 0.0
          %v1073 = vpack.c.bf16 %v1057, %v1057
          %v1074 = vpack.c.bf16 %v1058, %v1058
          %v1075 = vpack.c.bf16 %v1059, %v1059
          %v1076 = vpack.c.bf16 %v1060, %v1060
          %v1077 = vpack.c.bf16 %v1061, %v1061
          %v1078 = vpack.c.bf16 %v1062, %v1062
          %v1079 = vpack.c.bf16 %v1063, %v1063
          %v1080 = vpack.c.bf16 %v1064, %v1064
          %v1081 = vpack.c.bf16 %v1065, %v1065
          %v1082 = vpack.c.bf16 %v1066, %v1066
          %v1083 = vpack.c.bf16 %v1067, %v1067
          %v1084 = vpack.c.bf16 %v1068, %v1068
          %v1085 = vpack.c.bf16 %v1069, %v1069
          %v1086 = vpack.c.bf16 %v1070, %v1070
          %v1087 = vpack.c.bf16 %v1071, %v1071
          %v1088 = vpack.c.bf16 %v1072, %v1072
          %1089 = vst [vmem:[%s363] sm:$0xf] %v1073
          %1090 = vst [vmem:[%s363 + $0x4] sm:$0xf] %v1074
          %1091 = vst [vmem:[%s363 + $0x8] sm:$0xf] %v1075
          %1092 = vst [vmem:[%s363 + $0xc] sm:$0xf] %v1076
          %1093 = vst [vmem:[%s363 + $0x10] sm:$0xf] %v1077
          %1094 = vst [vmem:[%s363 + $0x14] sm:$0xf] %v1078
          %1095 = vst [vmem:[%s363 + $0x18] sm:$0xf] %v1079
          %1096 = vst [vmem:[%s363 + $0x1c] sm:$0xf] %v1080
          %1097 = vst [vmem:[%s363 + $0x20] sm:$0xf] %v1081
          %1098 = vst [vmem:[%s363 + $0x24] sm:$0xf] %v1082
          %1099 = vst [vmem:[%s363 + $0x28] sm:$0xf] %v1083
          %1100 = vst [vmem:[%s363 + $0x2c] sm:$0xf] %v1084
          %1101 = vst [vmem:[%s363 + $0x30] sm:$0xf] %v1085
          %1102 = vst [vmem:[%s363 + $0x34] sm:$0xf] %v1086
          %1103 = vst [vmem:[%s363 + $0x38] sm:$0xf] %v1087
          %1104 = vst [vmem:[%s363 + $0x3c] sm:$0xf] %v1088
        $region98: #{tpu_custom_call.1} parent=77 // pred_fallthru
          _
        %s1105 = sand.u32 %s180, 1
        %s1106 = scalar_lea.sflag [#allocation6], %s1105
        %s1107 = sand.u32 %s180, 1
        %s1108 = smul.addr %s1107, 64
        %s1109 = scalar_lea.vmem [#allocation9], %s1108
        // Predicated region
        $region99: #{tpu_custom_call.1} parent=77 // pred_check
          %p1110 = pneg %p190
        $region100: #{tpu_custom_call.1} parent=77 // pred_check_branch
          %1112 = sbr.rel (%p1110) target = $region102
        $region101: #{tpu_custom_call.1} parent=77 // pred_region
          %s1113 = smul.u32 16, %s26
          %1115 = vsyncadd %s1106, 0
          %s1116 = smul.addr %s1113, 4
          %s1117 = scalar_lea.hbm %s6, %s1116
          %s1118 = sshll.u32 %s1109, 4
          %s1119 = int_to_ptr.vmem [resolvable:$true] %s1118
          %s1120 = sshll.u32 %s1117, 4
          %s1121 = int_to_ptr.hbm [resolvable:$true] %s1120
          %1126 = dma.vmem_to_hbm [thread:$0]  %s1119, 1024, %s1121, %s1106, 64, 64, 4
        $region102: #{tpu_custom_call.1} parent=77 // pred_fallthru
          _
      $region78: #{tpu_custom_call.1} parent=5 // pred_fallthru
        _
      %p1127 = scmp.le.s32.totalorder 2, %s17
      // Predicated region
      $region103: #{tpu_custom_call.1} parent=5 // pred_check
        %p1128 = pneg %p1127
      $region104: #{tpu_custom_call.1} parent=5 // pred_check_branch
        %1130 = sbr.rel (%p1128) target = $region106
      $region105: #{tpu_custom_call.1} parent=5 // pred_region
        %s1131 = ssub.s32 %s17, 2
        // Predicated region
        $region107: #{tpu_custom_call.1} parent=105 // pred_check
          %p1132 = pneg %p196
        $region108: #{tpu_custom_call.1} parent=105 // pred_check_branch
          %1134 = sbr.rel (%p1132) target = $region110
        $region109: #{tpu_custom_call.1} parent=105 // pred_region
          %s1135 = sand.u32 %s181, 1
          %s1136 = scalar_lea.sflag [#allocation6], %s1135
          %s1137 = sand.u32 %s181, 1
          %s1138 = smul.addr %s1137, 64
          %s1139 = scalar_lea.vmem [#allocation9], %s1138
          %1141 = dma.done %s1136, 1024
        $region110: #{tpu_custom_call.1} parent=105 // pred_fallthru
          _
      $region106: #{tpu_custom_call.1} parent=5 // pred_fallthru
        _
    $region6: #{tpu_custom_call.1} parent=1 // loop_footer
      %s21 = sadd.s32 1, %s17
    $region7: #{tpu_custom_call.1} parent=1 // loop_footer_branch
      %16 = sbr.rel target = $region3
    $region8: #{tpu_custom_call.1} parent=1 // loop_exit
      _
    %1142 = vsyncpa [#allocation5], 1
    %s1143 = scalar_lea.sflag [#allocation5], 1
    %1144 = vsyncpa %s1143, 1
    %1145 = vsyncpa [#allocation8], 1
    %1146 = vsyncpa [#allocation6], 1
    %s1147 = scalar_lea.sflag [#allocation6], 1
    %1148 = vsyncpa %s1147, 1

</llo_original>
